<compile_context>
chip_gen: v7x
topology: tpu7x:2x2x1
jax: 0.10.0
libtpu: 0.0.40
codegen_flags: <defaults>
</compile_context>

<pallas_src>
import jax
import jax.numpy as jnp
from jax.experimental import pallas as pl
from jax.experimental.pallas import tpu as pltpu


HIDDEN = 256
OUT_DIM = 18
OUT_PAD = 128  # lane-dense padded output width (multiple of 128)


def _round_up(n, m):
    return ((n + m - 1) // m) * m


def _mlp_kernel(x_ref, w1_ref, b1_ref, w2_ref, b2_ref, w3_ref, b3_ref, o_ref):
    # Layer 1: Linear (f32 accumulate) + bias + ReLU; downcast fused into the
    # same chain so only the narrow intermediate is materialized.
    x = x_ref[...].astype(w1_ref.dtype)
    h1 = jnp.maximum(
        jnp.dot(x, w1_ref[...], preferred_element_type=jnp.float32) + b1_ref[...],
        0.0,
    ).astype(w2_ref.dtype)
    # Layer 2: Linear + bias + ReLU.
    h2 = jnp.maximum(
        jnp.dot(h1, w2_ref[...], preferred_element_type=jnp.float32) + b2_ref[...],
        0.0,
    ).astype(w3_ref.dtype)
    # Layer 3 (padded to 128 output lanes) + Sigmoid; lane-dense store in the
    # (narrow) output dtype.
    logits = jnp.dot(h2, w3_ref[...], preferred_element_type=jnp.float32) + b3_ref[...]
    o_ref[...] = jax.nn.sigmoid(logits).astype(o_ref.dtype)


def prepare_params(params, compute_dtype=jnp.bfloat16):
    """One-time parameter prep: cast MXU operands, lane-pad layer 3 to OUT_PAD.

    Hoisted out of the per-call path so the casts/pads (~0.8 MB of HBM
    traffic) don't re-run on every forward. Use compute_dtype=jnp.float32 as
    the validation escape hatch.
    """
    w1, b1, w2, b2, w3, b3 = params
    w1c = w1.astype(compute_dtype)
    w2c = w2.astype(compute_dtype)
    w3c = jnp.pad(w3, ((0, 0), (0, OUT_PAD - OUT_DIM))).astype(compute_dtype)
    b1r = b1.reshape(1, HIDDEN).astype(jnp.float32)
    b2r = b2.reshape(1, HIDDEN).astype(jnp.float32)
    b3r = jnp.pad(b3.reshape(1, OUT_DIM),
                  ((0, 0), (0, OUT_PAD - OUT_DIM))).astype(jnp.float32)
    return (w1c, b1r, w2c, b2r, w3c, b3r)


def symbolic_receiver_mlp(x, prepared_params, *, tile_b=1024, min_grid_steps=4,
                          out_dtype=jnp.float32):
    """x: (B, 1, HIDDEN) -> (B, OUT_DIM) in out_dtype (matches squeeze(dim=1)).

    `prepared_params` comes from prepare_params(). x may be f32 or bf16; the
    kernel casts it to the weight dtype in-register (no wrapper-side cast).
    """
    w1c, b1r, w2c, b2r, w3c, b3r = prepared_params
    B = x.shape[0]
    x2d = x.reshape(B, HIDDEN)  # squeeze of the singleton seq dim (glue, not compute)

    # Batch tile: big enough to amortize per-step overhead / MXU weight push,
    # small enough to give >= min_grid_steps grid steps (v7x megacore);
    # multiple of 8 sublanes. For B <= TB the single block covers the whole
    # (unpadded) batch exactly, which is legal for any B.
    TB = min(tile_b, _round_up(pl.cdiv(B, min_grid_steps), 8))
    if B <= TB:
        TB = B  # block dim == full array dim (no padding, incl. B < 8)
    grid = (pl.cdiv(B, TB),)  # ragged last block handled by Pallas; no jnp.pad copy

    store_dtype = w1c.dtype  # bf16 store on the fast path, f32 on validation path
    resident = lambda shape: pl.BlockSpec(shape, lambda i: (0, 0))  # VMEM-resident

    flops = 2 * B * HIDDEN * (2 * HIDDEN + OUT_PAD)
    bytes_accessed = (
        x2d.size * x2d.dtype.itemsize
        + sum(int(a.size) * a.dtype.itemsize for a in prepared_params)
        + B * OUT_PAD * jnp.dtype(store_dtype).itemsize
    )

    out = pl.pallas_call(
        _mlp_kernel,
        out_shape=jax.ShapeDtypeStruct((B, OUT_PAD), store_dtype),
        grid=grid,
        in_specs=[
            pl.BlockSpec((TB, HIDDEN), lambda i: (i, 0)),          # x: streamed over batch
            resident((HIDDEN, HIDDEN)), resident((1, HIDDEN)),     # w1, b1 (constant index -> no re-DMA)
            resident((HIDDEN, HIDDEN)), resident((1, HIDDEN)),     # w2, b2
            resident((HIDDEN, OUT_PAD)), resident((1, OUT_PAD)),   # w3, b3 (lane-padded)
        ],
        out_specs=pl.BlockSpec((TB, OUT_PAD), lambda i: (i, 0)),
        compiler_params=pltpu.CompilerParams(
            dimension_semantics=("parallel",),
            # Footprint is only a few MB even at TB=1024, so 32 MiB is safe on
            # every generation including v7x's 64 MiB physical VMEM.
            vmem_limit_bytes=32 * 1024 * 1024,
        ),
        cost_estimate=pl.CostEstimate(
            flops=flops,
            transcendentals=B * OUT_DIM,
            bytes_accessed=bytes_accessed,
        ),
    )(x2d, w1c, b1r, w2c, b2r, w3c, b3r)

    # Strip lane padding (padded lanes hold sigmoid(0)=0.5 and are discarded)
    # and widen to the requested dtype — tiny (B, 18) epilogue.
    return out[:, :OUT_DIM].astype(out_dtype)


def init_params(key):
    """Deterministic kaiming-style init (fan_in, normal) for the 3 Linear layers."""
    k1, k2, k3 = jax.random.split(key, 3)

    def kaiming(k, fan_in, fan_out):
        std = (2.0 / fan_in) ** 0.5
        # stored as (in, out) so the kernel computes x @ W
        return jax.random.normal(k, (fan_in, fan_out), jnp.float32) * std

    w1 = kaiming(k1, HIDDEN, HIDDEN)
    b1 = jnp.zeros((1, HIDDEN), jnp.float32)
    w2 = kaiming(k2, HIDDEN, HIDDEN)
    b2 = jnp.zeros((1, HIDDEN), jnp.float32)
    w3 = kaiming(k3, HIDDEN, OUT_DIM)
    b3 = jnp.zeros((1, OUT_DIM), jnp.float32)
    return (w1, b1, w2, b2, w3, b3)


def reference(x, params):
    """Pure-JAX f32 reference of the PyTorch forward."""
    w1, b1, w2, b2, w3, b3 = params
    h = jnp.maximum(x @ w1 + b1, 0.0)
    h = jnp.maximum(h @ w2 + b2, 0.0)
    out = jax.nn.sigmoid(h @ w3 + b3)
    return jnp.squeeze(out, axis=1)


if __name__ == "__main__":
    key = jax.random.PRNGKey(0)
    kp, kx = jax.random.split(key)
    params = init_params(kp)

    B = 4
    x = jax.random.normal(kx, (B, 1, HIDDEN), jnp.float32)
    ref = reference(x, params)

    # f32 compute/store path: should match the f32 reference tightly.
    prep_f32 = prepare_params(params, compute_dtype=jnp.float32)
    out_f32 = jax.block_until_ready(symbolic_receiver_mlp(x, prep_f32))
    assert out_f32.shape == (B, OUT_DIM), out_f32.shape
    assert jnp.allclose(out_f32, ref, atol=1e-5, rtol=1e-5), float(
        jnp.max(jnp.abs(out_f32 - ref)))

    # Default fast path: bf16 MXU operands + bf16 lane-dense store, f32 accum.
    # Params prepared ONCE and reused across calls.
    prep_bf16 = prepare_params(params)
    out_bf16 = jax.block_until_ready(symbolic_receiver_mlp(x, prep_bf16))
    assert out_bf16.shape == (B, OUT_DIM), out_bf16.shape
    assert jnp.allclose(out_bf16, ref, atol=4e-2), float(
        jnp.max(jnp.abs(out_bf16 - ref)))

    # Ragged multi-step grid: exercises the no-pad cdiv path (grid=3 with a
    # partial last block) and the v7x-style multi-step grid sizing.
    B2 = 20
    x2 = jax.random.normal(jax.random.PRNGKey(1), (B2, 1, HIDDEN), jnp.float32)
    ref2 = reference(x2, params)
    out2 = jax.block_until_ready(
        symbolic_receiver_mlp(x2, prep_bf16, tile_b=8, min_grid_steps=4))
    assert out2.shape == (B2, OUT_DIM), out2.shape
    assert jnp.allclose(out2, ref2, atol=4e-2), float(
        jnp.max(jnp.abs(out2 - ref2)))

    print("KERNEL_OK")
</pallas_src>

<mosaic_0001>
module attributes {stable_mosaic.version = 11 : i64} {
  func.func @_mlp_kernel(%arg0: i32, %arg1: memref<4x256xf32, #tpu.memory_space<vmem>>, %arg2: memref<256x256xf32, #tpu.memory_space<vmem>>, %arg3: memref<1x256xf32, #tpu.memory_space<vmem>>, %arg4: memref<256x256xf32, #tpu.memory_space<vmem>>, %arg5: memref<1x256xf32, #tpu.memory_space<vmem>>, %arg6: memref<256x128xf32, #tpu.memory_space<vmem>>, %arg7: memref<1x128xf32, #tpu.memory_space<vmem>>, %arg8: memref<4x128xf32, #tpu.memory_space<vmem>>) attributes {dimension_semantics = [#tpu.dimension_semantics<parallel>], iteration_bounds = array<i64: 1>, scalar_prefetch = 0 : i64, scratch_operands = 0 : i64, tpu.core_type = #tpu.core_type<tc>, window_params = [{transform_indices = @transform_0, window_bounds = array<i64: 4, 256>}, {pipeline_mode = #tpu.pipeline_mode<synchronous>, transform_indices = @transform_1, window_bounds = array<i64: 256, 256>}, {pipeline_mode = #tpu.pipeline_mode<synchronous>, transform_indices = @transform_2, window_bounds = array<i64: 1, 256>}, {pipeline_mode = #tpu.pipeline_mode<synchronous>, transform_indices = @transform_3, window_bounds = array<i64: 256, 256>}, {pipeline_mode = #tpu.pipeline_mode<synchronous>, transform_indices = @transform_4, window_bounds = array<i64: 1, 256>}, {pipeline_mode = #tpu.pipeline_mode<synchronous>, transform_indices = @transform_5, window_bounds = array<i64: 256, 128>}, {pipeline_mode = #tpu.pipeline_mode<synchronous>, transform_indices = @transform_6, window_bounds = array<i64: 1, 128>}, {transform_indices = @transform_7, window_bounds = array<i64: 4, 128>}]} {
    %c0 = arith.constant 0 : index
    %c0_0 = arith.constant 0 : index
    %0 = vector.load %arg1[%c0, %c0_0] : memref<4x256xf32, #tpu.memory_space<vmem>>, vector<4x256xf32>
    %c0_1 = arith.constant 0 : index
    %c0_2 = arith.constant 0 : index
    %1 = vector.load %arg2[%c0_1, %c0_2] : memref<256x256xf32, #tpu.memory_space<vmem>>, vector<256x256xf32>
    %cst = arith.constant dense<0.000000e+00> : vector<4x256xf32>
    %2 = tpu.matmul %0, %1, %cst {dimension_numbers = #tpu.dot_dimension_numbers<[1], [0], [0], [1], [0, 0, 1, 1], [], []>} : vector<4x256xf32>, vector<256x256xf32>, vector<4x256xf32> -> vector<4x256xf32>
    %c0_3 = arith.constant 0 : index
    %c0_4 = arith.constant 0 : index
    %3 = vector.load %arg3[%c0_3, %c0_4] : memref<1x256xf32, #tpu.memory_space<vmem>>, vector<1x256xf32>
    %4 = vector.broadcast %3 : vector<1x256xf32> to vector<4x256xf32>
    %5 = arith.addf %2, %4 : vector<4x256xf32>
    %cst_5 = arith.constant 0.000000e+00 : f32
    %6 = vector.broadcast %cst_5 : f32 to vector<4x256xf32>
    %7 = arith.maximumf %5, %6 : vector<4x256xf32>
    %c0_6 = arith.constant 0 : index
    %c0_7 = arith.constant 0 : index
    %8 = vector.load %arg4[%c0_6, %c0_7] : memref<256x256xf32, #tpu.memory_space<vmem>>, vector<256x256xf32>
    %cst_8 = arith.constant dense<0.000000e+00> : vector<4x256xf32>
    %9 = tpu.matmul %7, %8, %cst_8 {dimension_numbers = #tpu.dot_dimension_numbers<[1], [0], [0], [1], [0, 0, 1, 1], [], []>} : vector<4x256xf32>, vector<256x256xf32>, vector<4x256xf32> -> vector<4x256xf32>
    %c0_9 = arith.constant 0 : index
    %c0_10 = arith.constant 0 : index
    %10 = vector.load %arg5[%c0_9, %c0_10] : memref<1x256xf32, #tpu.memory_space<vmem>>, vector<1x256xf32>
    %11 = vector.broadcast %10 : vector<1x256xf32> to vector<4x256xf32>
    %12 = arith.addf %9, %11 : vector<4x256xf32>
    %cst_11 = arith.constant 0.000000e+00 : f32
    %13 = vector.broadcast %cst_11 : f32 to vector<4x256xf32>
    %14 = arith.maximumf %12, %13 : vector<4x256xf32>
    %c0_12 = arith.constant 0 : index
    %c0_13 = arith.constant 0 : index
    %15 = vector.load %arg6[%c0_12, %c0_13] : memref<256x128xf32, #tpu.memory_space<vmem>>, vector<256x128xf32>
    %cst_14 = arith.constant dense<0.000000e+00> : vector<4x128xf32>
    %16 = tpu.matmul %14, %15, %cst_14 {dimension_numbers = #tpu.dot_dimension_numbers<[1], [0], [0], [1], [0, 0, 1, 1], [], []>} : vector<4x256xf32>, vector<256x128xf32>, vector<4x128xf32> -> vector<4x128xf32>
    %c0_15 = arith.constant 0 : index
    %c0_16 = arith.constant 0 : index
    %17 = vector.load %arg7[%c0_15, %c0_16] : memref<1x128xf32, #tpu.memory_space<vmem>>, vector<1x128xf32>
    %18 = vector.broadcast %17 : vector<1x128xf32> to vector<4x128xf32>
    %19 = arith.addf %16, %18 : vector<4x128xf32>
    %20 = arith.negf %19 : vector<4x128xf32>
    %21 = math.exp %20 : vector<4x128xf32>
    %cst_17 = arith.constant 1.000000e+00 : f32
    %22 = vector.broadcast %cst_17 : f32 to vector<4x128xf32>
    %23 = arith.addf %22, %21 : vector<4x128xf32>
    %24 = arith.divf %22, %23 : vector<4x128xf32>
    %c0_18 = arith.constant 0 : index
    %c0_19 = arith.constant 0 : index
    %25 = vector.load %arg8[%c0_18, %c0_19] : memref<4x128xf32, #tpu.memory_space<vmem>>, vector<4x128xf32>
    tpu.vector_store %arg8[%c0_18, %c0_19], %24 {strides = array<i32>} : memref<4x128xf32, #tpu.memory_space<vmem>>, vector<4x128xf32>,
    return
  }
  func.func @transform_0(%arg0: i32) -> (i32, i32) {
    %c0_i32 = arith.constant 0 : i32
    %c0_i32_0 = arith.constant 0 : i32
    return %arg0, %c0_i32 : i32, i32
  }
  func.func @transform_1(%arg0: i32) -> (i32, i32) {
    %c0_i32 = arith.constant 0 : i32
    %c0_i32_0 = arith.constant 0 : i32
    %c0_i32_1 = arith.constant 0 : i32
    return %c0_i32, %c0_i32_0 : i32, i32
  }
  func.func @transform_2(%arg0: i32) -> (i32, i32) {
    %c0_i32 = arith.constant 0 : i32
    %c0_i32_0 = arith.constant 0 : i32
    %c0_i32_1 = arith.constant 0 : i32
    return %c0_i32, %c0_i32_0 : i32, i32
  }
  func.func @transform_3(%arg0: i32) -> (i32, i32) {
    %c0_i32 = arith.constant 0 : i32
    %c0_i32_0 = arith.constant 0 : i32
    %c0_i32_1 = arith.constant 0 : i32
    return %c0_i32, %c0_i32_0 : i32, i32
  }
  func.func @transform_4(%arg0: i32) -> (i32, i32) {
    %c0_i32 = arith.constant 0 : i32
    %c0_i32_0 = arith.constant 0 : i32
    %c0_i32_1 = arith.constant 0 : i32
    return %c0_i32, %c0_i32_0 : i32, i32
  }
  func.func @transform_5(%arg0: i32) -> (i32, i32) {
    %c0_i32 = arith.constant 0 : i32
    %c0_i32_0 = arith.constant 0 : i32
    %c0_i32_1 = arith.constant 0 : i32
    return %c0_i32, %c0_i32_0 : i32, i32
  }
  func.func @transform_6(%arg0: i32) -> (i32, i32) {
    %c0_i32 = arith.constant 0 : i32
    %c0_i32_0 = arith.constant 0 : i32
    %c0_i32_1 = arith.constant 0 : i32
    return %c0_i32, %c0_i32_0 : i32, i32
  }
  func.func @transform_7(%arg0: i32) -> (i32, i32) {
    %c0_i32 = arith.constant 0 : i32
    %c0_i32_0 = arith.constant 0 : i32
    return %arg0, %c0_i32 : i32, i32
  }
}

</mosaic_0001>

<llo_original>
// kernel: tpu_custom_call.1
$region0: #{tpu_custom_call.1}
  #allocation0 [shape = 'u32[]', space=smem, size = 0x4, offset = 0x4, fixed_abs, tag = 'smem constant byte address 0x4 - core index']
  #allocation1 [shape = 'u32[144,128]{1,0:T(1,128)}', space=vmem, size = 0x12000, scoped, tag = 'internal scratch']
  %s0 = inlined_call_operand.hbm [shape: f32[4,256], index: 0, kind: input, shape index: {}]
  %s1 = inlined_call_operand.hbm [shape: f32[256,256], index: 1, kind: input, shape index: {}]
  %s2 = inlined_call_operand.vmem [shape: f32[1,256], index: 2, kind: input, shape index: {}]
  %s3 = inlined_call_operand.hbm [shape: f32[256,256], index: 3, kind: input, shape index: {}]
  %s4 = inlined_call_operand.vmem [shape: f32[1,256], index: 4, kind: input, shape index: {}]
  %s5 = inlined_call_operand.hbm [shape: f32[256,128], index: 5, kind: input, shape index: {}]
  %s6 = inlined_call_operand.vmem [shape: f32[1,128], index: 6, kind: input, shape index: {}]
  %s7 = inlined_call_operand.hbm [shape: f32[4,128], index: 7, kind: output, shape index: {}]
  %s8 = sld [smem:[#allocation0]]
  $region54: #{tpu_custom_call.1} parent=0
    _
  %s10 = ssub.s32 1, %s8
  %s11 = scalar_select 0, %s10, %s8
  $region1: #{tpu_custom_call.1} parent=0
    #allocation2 [shape = 'u8[4096]{0}', space=vmem, size = 0x1000, scoped, tag = 'input window, operand 0, single buffered']
    #allocation3 [shape = 's32[1]{0}', space=sflag, size = 0x4, scoped, tag = 'scoped memory for tpu_custom_call.1']
    #allocation4 [shape = 's32[1]{0}', space=sflag, size = 0x4, scoped, tag = 'scoped memory for tpu_custom_call.1']
    #allocation5 [shape = 'u8[262144]{0}', space=vmem, size = 0x40000, scoped, tag = 'input window, operand 1, single buffered']
    #allocation6 [shape = 's32[1]{0}', space=sflag, size = 0x4, scoped, tag = 'scoped memory for tpu_custom_call.1']
    #allocation7 [shape = 'u8[262144]{0}', space=vmem, size = 0x40000, scoped, tag = 'input window, operand 3, single buffered']
    #allocation8 [shape = 'u8[131072]{0}', space=vmem, size = 0x20000, scoped, tag = 'input window, operand 5, single buffered']
    #allocation9 [shape = 's32[1]{0}', space=sflag, size = 0x4, scoped, tag = 'scoped memory for tpu_custom_call.1']
    #allocation10 [shape = 'u8[2048]{0}', space=vmem, size = 0x800, scoped, tag = 'output window, operand 0, single buffered']
    %12 = vsyncpa [#allocation3], 0
    %13 = vsyncpa [#allocation6], 0
    %14 = vsyncpa [#allocation9], 0
    %15 = vsyncpa [#allocation4], 0
    // Predicated region
    $region2: #{tpu_custom_call.1} parent=1 // pred_check
      _
    $region3: #{tpu_custom_call.1} parent=1 // pred_check_branch
      %17 = sbr.rel (0) target = $region5
    $region4: #{tpu_custom_call.1} parent=1 // pred_region
      %s19 = ssub.s32 128, 128
      %20 = vsyncadd [#allocation3], %s19
      %s22 = sshll.u32 [#allocation2], 4
      %s23 = int_to_ptr.vmem [resolvable:$true] %s22
      %25 = dma.hbm_to_vmem [thread:$0]  %s0, 128, %s23, [#allocation3]
    $region5: #{tpu_custom_call.1} parent=1 // pred_fallthru
      _
    // Predicated region
    $region6: #{tpu_custom_call.1} parent=1 // pred_check
      _
    $region7: #{tpu_custom_call.1} parent=1 // pred_check_branch
      %27 = sbr.rel (0) target = $region9
    $region8: #{tpu_custom_call.1} parent=1 // pred_region
      %s29 = ssub.s32 8192, 8192
      %30 = vsyncadd [#allocation6], %s29
      %s31 = sshll.u32 [#allocation5], 4
      %s32 = int_to_ptr.vmem [resolvable:$true] %s31
      %37 = dma.hbm_to_vmem [thread:$0]  %s1, 8192, %s32, [#allocation6], 256, 256, 16
    $region9: #{tpu_custom_call.1} parent=1 // pred_fallthru
      _
    // Predicated region
    $region10: #{tpu_custom_call.1} parent=1 // pred_check
      _
    $region11: #{tpu_custom_call.1} parent=1 // pred_check_branch
      %39 = sbr.rel (0) target = $region13
    $region12: #{tpu_custom_call.1} parent=1 // pred_region
      _
    $region13: #{tpu_custom_call.1} parent=1 // pred_fallthru
      _
    // Predicated region
    $region14: #{tpu_custom_call.1} parent=1 // pred_check
      _
    $region15: #{tpu_custom_call.1} parent=1 // pred_check_branch
      %41 = sbr.rel (0) target = $region17
    $region16: #{tpu_custom_call.1} parent=1 // pred_region
      %s43 = ssub.s32 8192, 8192
      %44 = vsyncadd [#allocation6], %s43
      %s45 = sshll.u32 [#allocation7], 4
      %s46 = int_to_ptr.vmem [resolvable:$true] %s45
      %51 = dma.hbm_to_vmem [thread:$0]  %s3, 8192, %s46, [#allocation6], 256, 256, 16
    $region17: #{tpu_custom_call.1} parent=1 // pred_fallthru
      _
    // Predicated region
    $region18: #{tpu_custom_call.1} parent=1 // pred_check
      _
    $region19: #{tpu_custom_call.1} parent=1 // pred_check_branch
      %53 = sbr.rel (0) target = $region21
    $region20: #{tpu_custom_call.1} parent=1 // pred_region
      _
    $region21: #{tpu_custom_call.1} parent=1 // pred_fallthru
      _
    // Predicated region
    $region22: #{tpu_custom_call.1} parent=1 // pred_check
      _
    $region23: #{tpu_custom_call.1} parent=1 // pred_check_branch
      %55 = sbr.rel (0) target = $region25
    $region24: #{tpu_custom_call.1} parent=1 // pred_region
      %s57 = ssub.s32 4096, 4096
      %58 = vsyncadd [#allocation9], %s57
      %s59 = sshll.u32 [#allocation8], 4
      %s60 = int_to_ptr.vmem [resolvable:$true] %s59
      %65 = dma.hbm_to_vmem [thread:$0]  %s5, 4096, %s60, [#allocation9], 128, 128, 8
    $region25: #{tpu_custom_call.1} parent=1 // pred_fallthru
      _
    // Predicated region
    $region26: #{tpu_custom_call.1} parent=1 // pred_check
      _
    $region27: #{tpu_custom_call.1} parent=1 // pred_check_branch
      %67 = sbr.rel (0) target = $region29
    $region28: #{tpu_custom_call.1} parent=1 // pred_region
      _
    $region29: #{tpu_custom_call.1} parent=1 // pred_fallthru
      _
    // Predicated region
    $region30: #{tpu_custom_call.1} parent=1 // pred_check
      _
    $region31: #{tpu_custom_call.1} parent=1 // pred_check_branch
      %69 = sbr.rel (0) target = $region33
    $region32: #{tpu_custom_call.1} parent=1 // pred_region
      %70 = dma.done [#allocation3], 128
    $region33: #{tpu_custom_call.1} parent=1 // pred_fallthru
      _
    // Predicated region
    $region34: #{tpu_custom_call.1} parent=1 // pred_check
      _
    $region35: #{tpu_custom_call.1} parent=1 // pred_check_branch
      %72 = sbr.rel (0) target = $region37
    $region36: #{tpu_custom_call.1} parent=1 // pred_region
      %73 = dma.done [#allocation6], 8192
    $region37: #{tpu_custom_call.1} parent=1 // pred_fallthru
      _
    // Predicated region
    $region38: #{tpu_custom_call.1} parent=1 // pred_check
      _
    $region39: #{tpu_custom_call.1} parent=1 // pred_check_branch
      %75 = sbr.rel (0) target = $region41
    $region40: #{tpu_custom_call.1} parent=1 // pred_region
      %76 = dma.done [#allocation6], 8192
    $region41: #{tpu_custom_call.1} parent=1 // pred_fallthru
      _
    // Predicated region
    $region42: #{tpu_custom_call.1} parent=1 // pred_check
      _
    $region43: #{tpu_custom_call.1} parent=1 // pred_check_branch
      %78 = sbr.rel (0) target = $region45
    $region44: #{tpu_custom_call.1} parent=1 // pred_region
      %79 = dma.done [#allocation9], 4096
    $region45: #{tpu_custom_call.1} parent=1 // pred_fallthru
      _
    %v80 = vld [vmem:[#allocation2] sm:$0xff]
    %v81 = vld [vmem:[#allocation5] sm:$0xff]
    %v82 = vld [vmem:[#allocation5 + $0x8] sm:$0xff]
    %v83 = vld [vmem:[#allocation5 + $0x10] sm:$0xff]
    %v84 = vld [vmem:[#allocation5 + $0x18] sm:$0xff]
    %v85 = vld [vmem:[#allocation5 + $0x20] sm:$0xff]
    %v86 = vld [vmem:[#allocation5 + $0x28] sm:$0xff]
    %v87 = vld [vmem:[#allocation5 + $0x30] sm:$0xff]
    %v88 = vld [vmem:[#allocation5 + $0x38] sm:$0xff]
    %v89 = vld [vmem:[#allocation5 + $0x40] sm:$0xff]
    %v90 = vld [vmem:[#allocation5 + $0x48] sm:$0xff]
    %v91 = vld [vmem:[#allocation5 + $0x50] sm:$0xff]
    %v92 = vld [vmem:[#allocation5 + $0x58] sm:$0xff]
    %v93 = vld [vmem:[#allocation5 + $0x60] sm:$0xff]
    %v94 = vld [vmem:[#allocation5 + $0x68] sm:$0xff]
    %v95 = vld [vmem:[#allocation5 + $0x70] sm:$0xff]
    %v96 = vld [vmem:[#allocation5 + $0x78] sm:$0xff]
    %v97 = vld [vmem:[#allocation5 + $0x80] sm:$0xff]
    %v98 = vld [vmem:[#allocation5 + $0x88] sm:$0xff]
    %v99 = vld [vmem:[#allocation5 + $0x90] sm:$0xff]
    %v100 = vld [vmem:[#allocation5 + $0x98] sm:$0xff]
    %v101 = vld [vmem:[#allocation5 + $0xa0] sm:$0xff]
    %v102 = vld [vmem:[#allocation5 + $0xa8] sm:$0xff]
    %v103 = vld [vmem:[#allocation5 + $0xb0] sm:$0xff]
    %v104 = vld [vmem:[#allocation5 + $0xb8] sm:$0xff]
    %v105 = vld [vmem:[#allocation5 + $0xc0] sm:$0xff]
    %v106 = vld [vmem:[#allocation5 + $0xc8] sm:$0xff]
    %v107 = vld [vmem:[#allocation5 + $0xd0] sm:$0xff]
    %v108 = vld [vmem:[#allocation5 + $0xd8] sm:$0xff]
    %v109 = vld [vmem:[#allocation5 + $0xe0] sm:$0xff]
    %v110 = vld [vmem:[#allocation5 + $0xe8] sm:$0xff]
    %v111 = vld [vmem:[#allocation5 + $0xf0] sm:$0xff]
    %v112 = vld [vmem:[#allocation5 + $0xf8] sm:$0xff]
    %v113 = vld [vmem:[#allocation5 + $0x100] sm:$0xff]
    %v114 = vld [vmem:[#allocation5 + $0x108] sm:$0xff]
    %v115 = vld [vmem:[#allocation5 + $0x110] sm:$0xff]
    %v116 = vld [vmem:[#allocation5 + $0x118] sm:$0xff]
    %v117 = vld [vmem:[#allocation5 + $0x120] sm:$0xff]
    %v118 = vld [vmem:[#allocation5 + $0x128] sm:$0xff]
    %v119 = vld [vmem:[#allocation5 + $0x130] sm:$0xff]
    %v120 = vld [vmem:[#allocation5 + $0x138] sm:$0xff]
    %v121 = vld [vmem:[#allocation5 + $0x140] sm:$0xff]
    %v122 = vld [vmem:[#allocation5 + $0x148] sm:$0xff]
    %v123 = vld [vmem:[#allocation5 + $0x150] sm:$0xff]
    %v124 = vld [vmem:[#allocation5 + $0x158] sm:$0xff]
    %v125 = vld [vmem:[#allocation5 + $0x160] sm:$0xff]
    %v126 = vld [vmem:[#allocation5 + $0x168] sm:$0xff]
    %v127 = vld [vmem:[#allocation5 + $0x170] sm:$0xff]
    %v128 = vld [vmem:[#allocation5 + $0x178] sm:$0xff]
    %v129 = vld [vmem:[#allocation5 + $0x180] sm:$0xff]
    %v130 = vld [vmem:[#allocation5 + $0x188] sm:$0xff]
    %v131 = vld [vmem:[#allocation5 + $0x190] sm:$0xff]
    %v132 = vld [vmem:[#allocation5 + $0x198] sm:$0xff]
    %v133 = vld [vmem:[#allocation5 + $0x1a0] sm:$0xff]
    %v134 = vld [vmem:[#allocation5 + $0x1a8] sm:$0xff]
    %v135 = vld [vmem:[#allocation5 + $0x1b0] sm:$0xff]
    %v136 = vld [vmem:[#allocation5 + $0x1b8] sm:$0xff]
    %v137 = vld [vmem:[#allocation5 + $0x1c0] sm:$0xff]
    %v138 = vld [vmem:[#allocation5 + $0x1c8] sm:$0xff]
    %v139 = vld [vmem:[#allocation5 + $0x1d0] sm:$0xff]
    %v140 = vld [vmem:[#allocation5 + $0x1d8] sm:$0xff]
    %v141 = vld [vmem:[#allocation5 + $0x1e0] sm:$0xff]
    %v142 = vld [vmem:[#allocation5 + $0x1e8] sm:$0xff]
    %v143 = vld [vmem:[#allocation5 + $0x1f0] sm:$0xff]
    %v144 = vld [vmem:[#allocation5 + $0x1f8] sm:$0xff]
    %v145 = vld [vmem:[%s2] sm:$0x3]
    %v147 = vlaneseq
    %v148 = vshrl.u32 %v147, 7
    %v149 = vsub.s32 0, %v148
    %v150 = vrot.slane %v145, %v149
    %v151 = vlaneseq
    %v152 = vshrl.u32 %v151, 7
    %v153 = vsub.s32 1, %v152
    %v154 = vrot.slane %v145, %v153
    %v158 = vcombine.high %v80, %v80
    %160 = vmatprep.subr.mxu0 %v82
    %161 = vmatpush1.msra.mxu0 %v81
    %162 = vmatprep.subr.mxu0 %v84
    %163 = vmatpush1.msra.mxu0 %v83
    %164 = vmatprep.subr.mxu0 %v86
    %165 = vmatpush1.msra.mxu0 %v85
    %166 = vmatprep.subr.mxu0 %v88
    %167 = vmatpush1.msra.mxu0 %v87
    %168 = vmatprep.subr.mxu0 %v90
    %169 = vmatpush1.msra.mxu0 %v89
    %170 = vmatprep.subr.mxu0 %v92
    %171 = vmatpush1.msra.mxu0 %v91
    %172 = vmatprep.subr.mxu0 %v94
    %173 = vmatpush1.msra.mxu0 %v93
    %174 = vmatprep.subr.mxu0 %v96
    %175 = vmatpush1.msra.mxu0 %v95
    %176 = vmatprep.subr.mxu0 %v98
    %177 = vmatpush1.msra.mxu0 %v97
    %178 = vmatprep.subr.mxu0 %v100
    %179 = vmatpush1.msra.mxu0 %v99
    %180 = vmatprep.subr.mxu0 %v102
    %181 = vmatpush1.msra.mxu0 %v101
    %182 = vmatprep.subr.mxu0 %v104
    %183 = vmatpush1.msra.mxu0 %v103
    %184 = vmatprep.subr.mxu0 %v106
    %185 = vmatpush1.msra.mxu0 %v105
    %186 = vmatprep.subr.mxu0 %v108
    %187 = vmatpush1.msra.mxu0 %v107
    %188 = vmatprep.subr.mxu0 %v110
    %189 = vmatpush1.msra.mxu0 %v109
    %190 = vmatprep.subr.mxu0 %v112
    %191 = vmatpush1.msra.mxu0 %v111
    %192 = vmatprep.subr.mxu0 %v114
    %193 = vmatpush1.msra.mxu0 %v113
    %194 = vmatprep.subr.mxu0 %v116
    %195 = vmatpush1.msra.mxu0 %v115
    %196 = vmatprep.subr.mxu0 %v118
    %197 = vmatpush1.msra.mxu0 %v117
    %198 = vmatprep.subr.mxu0 %v120
    %199 = vmatpush1.msra.mxu0 %v119
    %200 = vmatprep.subr.mxu0 %v122
    %201 = vmatpush1.msra.mxu0 %v121
    %202 = vmatprep.subr.mxu0 %v124
    %203 = vmatpush1.msra.mxu0 %v123
    %204 = vmatprep.subr.mxu0 %v126
    %205 = vmatpush1.msra.mxu0 %v125
    %206 = vmatprep.subr.mxu0 %v128
    %207 = vmatpush1.msra.mxu0 %v127
    %208 = vmatprep.subr.mxu0 %v130
    %209 = vmatpush1.msra.mxu0 %v129
    %210 = vmatprep.subr.mxu0 %v132
    %211 = vmatpush1.msra.mxu0 %v131
    %212 = vmatprep.subr.mxu0 %v134
    %213 = vmatpush1.msra.mxu0 %v133
    %214 = vmatprep.subr.mxu0 %v136
    %215 = vmatpush1.msra.mxu0 %v135
    %216 = vmatprep.subr.mxu0 %v138
    %217 = vmatpush1.msra.mxu0 %v137
    %218 = vmatprep.subr.mxu0 %v140
    %219 = vmatpush1.msra.mxu0 %v139
    %220 = vmatprep.subr.mxu0 %v142
    %221 = vmatpush1.msra.mxu0 %v141
    %222 = vmatprep.subr.mxu0 %v144
    %223 = vmatpush1.msra.mxu0 %v143
    %224 = vmatprep.mubr.f32.mxu0 %v158
    %225 = vmatmul.mubr.f32.gmra.mrb[0].mxu0 %v80
    %v226 = vpop.f32.mrb[0].mxu0
    %v227 = vadd.f32 %v150, %v226
    %v228 = vpop.f32.mrb[0].mxu0
    %v229 = vadd.f32 %v154, %v228
    %230 = vdwg.mxu0
    %v231 = vmax.f32 %v227, 0.0
    %v232 = vmax.f32 %v229, 0.0
    %v233 = vld [vmem:[#allocation7] sm:$0xff]
    %v234 = vld [vmem:[#allocation7 + $0x8] sm:$0xff]
    %v235 = vld [vmem:[#allocation7 + $0x10] sm:$0xff]
    %v236 = vld [vmem:[#allocation7 + $0x18] sm:$0xff]
    %v237 = vld [vmem:[#allocation7 + $0x20] sm:$0xff]
    %v238 = vld [vmem:[#allocation7 + $0x28] sm:$0xff]
    %v239 = vld [vmem:[#allocation7 + $0x30] sm:$0xff]
    %v240 = vld [vmem:[#allocation7 + $0x38] sm:$0xff]
    %v241 = vld [vmem:[#allocation7 + $0x40] sm:$0xff]
    %v242 = vld [vmem:[#allocation7 + $0x48] sm:$0xff]
    %v243 = vld [vmem:[#allocation7 + $0x50] sm:$0xff]
    %v244 = vld [vmem:[#allocation7 + $0x58] sm:$0xff]
    %v245 = vld [vmem:[#allocation7 + $0x60] sm:$0xff]
    %v246 = vld [vmem:[#allocation7 + $0x68] sm:$0xff]
    %v247 = vld [vmem:[#allocation7 + $0x70] sm:$0xff]
    %v248 = vld [vmem:[#allocation7 + $0x78] sm:$0xff]
    %v249 = vld [vmem:[#allocation7 + $0x80] sm:$0xff]
    %v250 = vld [vmem:[#allocation7 + $0x88] sm:$0xff]
    %v251 = vld [vmem:[#allocation7 + $0x90] sm:$0xff]
    %v252 = vld [vmem:[#allocation7 + $0x98] sm:$0xff]
    %v253 = vld [vmem:[#allocation7 + $0xa0] sm:$0xff]
    %v254 = vld [vmem:[#allocation7 + $0xa8] sm:$0xff]
    %v255 = vld [vmem:[#allocation7 + $0xb0] sm:$0xff]
    %v256 = vld [vmem:[#allocation7 + $0xb8] sm:$0xff]
    %v257 = vld [vmem:[#allocation7 + $0xc0] sm:$0xff]
    %v258 = vld [vmem:[#allocation7 + $0xc8] sm:$0xff]
    %v259 = vld [vmem:[#allocation7 + $0xd0] sm:$0xff]
    %v260 = vld [vmem:[#allocation7 + $0xd8] sm:$0xff]
    %v261 = vld [vmem:[#allocation7 + $0xe0] sm:$0xff]
    %v262 = vld [vmem:[#allocation7 + $0xe8] sm:$0xff]
    %v263 = vld [vmem:[#allocation7 + $0xf0] sm:$0xff]
    %v264 = vld [vmem:[#allocation7 + $0xf8] sm:$0xff]
    %v265 = vld [vmem:[#allocation7 + $0x100] sm:$0xff]
    %v266 = vld [vmem:[#allocation7 + $0x108] sm:$0xff]
    %v267 = vld [vmem:[#allocation7 + $0x110] sm:$0xff]
    %v268 = vld [vmem:[#allocation7 + $0x118] sm:$0xff]
    %v269 = vld [vmem:[#allocation7 + $0x120] sm:$0xff]
    %v270 = vld [vmem:[#allocation7 + $0x128] sm:$0xff]
    %v271 = vld [vmem:[#allocation7 + $0x130] sm:$0xff]
    %v272 = vld [vmem:[#allocation7 + $0x138] sm:$0xff]
    %v273 = vld [vmem:[#allocation7 + $0x140] sm:$0xff]
    %v274 = vld [vmem:[#allocation7 + $0x148] sm:$0xff]
    %v275 = vld [vmem:[#allocation7 + $0x150] sm:$0xff]
    %v276 = vld [vmem:[#allocation7 + $0x158] sm:$0xff]
    %v277 = vld [vmem:[#allocation7 + $0x160] sm:$0xff]
    %v278 = vld [vmem:[#allocation7 + $0x168] sm:$0xff]
    %v279 = vld [vmem:[#allocation7 + $0x170] sm:$0xff]
    %v280 = vld [vmem:[#allocation7 + $0x178] sm:$0xff]
    %v281 = vld [vmem:[#allocation7 + $0x180] sm:$0xff]
    %v282 = vld [vmem:[#allocation7 + $0x188] sm:$0xff]
    %v283 = vld [vmem:[#allocation7 + $0x190] sm:$0xff]
    %v284 = vld [vmem:[#allocation7 + $0x198] sm:$0xff]
    %v285 = vld [vmem:[#allocation7 + $0x1a0] sm:$0xff]
    %v286 = vld [vmem:[#allocation7 + $0x1a8] sm:$0xff]
    %v287 = vld [vmem:[#allocation7 + $0x1b0] sm:$0xff]
    %v288 = vld [vmem:[#allocation7 + $0x1b8] sm:$0xff]
    %v289 = vld [vmem:[#allocation7 + $0x1c0] sm:$0xff]
    %v290 = vld [vmem:[#allocation7 + $0x1c8] sm:$0xff]
    %v291 = vld [vmem:[#allocation7 + $0x1d0] sm:$0xff]
    %v292 = vld [vmem:[#allocation7 + $0x1d8] sm:$0xff]
    %v293 = vld [vmem:[#allocation7 + $0x1e0] sm:$0xff]
    %v294 = vld [vmem:[#allocation7 + $0x1e8] sm:$0xff]
    %v295 = vld [vmem:[#allocation7 + $0x1f0] sm:$0xff]
    %v296 = vld [vmem:[#allocation7 + $0x1f8] sm:$0xff]
    %v297 = vld [vmem:[%s4] sm:$0x3]
    %v299 = vlaneseq
    %v300 = vshrl.u32 %v299, 7
    %v301 = vsub.s32 0, %v300
    %v302 = vrot.slane %v297, %v301
    %v303 = vlaneseq
    %v304 = vshrl.u32 %v303, 7
    %v305 = vsub.s32 1, %v304
    %v306 = vrot.slane %v297, %v305
    %309 = vmatprep.subr.mxu0 %v234
    %310 = vmatpush1.msra.mxu0 %v233
    %311 = vmatprep.subr.mxu0 %v236
    %312 = vmatpush1.msra.mxu0 %v235
    %313 = vmatprep.subr.mxu0 %v238
    %314 = vmatpush1.msra.mxu0 %v237
    %315 = vmatprep.subr.mxu0 %v240
    %316 = vmatpush1.msra.mxu0 %v239
    %317 = vmatprep.subr.mxu0 %v242
    %318 = vmatpush1.msra.mxu0 %v241
    %319 = vmatprep.subr.mxu0 %v244
    %320 = vmatpush1.msra.mxu0 %v243
    %321 = vmatprep.subr.mxu0 %v246
    %322 = vmatpush1.msra.mxu0 %v245
    %323 = vmatprep.subr.mxu0 %v248
    %324 = vmatpush1.msra.mxu0 %v247
    %325 = vmatprep.subr.mxu0 %v250
    %326 = vmatpush1.msra.mxu0 %v249
    %327 = vmatprep.subr.mxu0 %v252
    %328 = vmatpush1.msra.mxu0 %v251
    %329 = vmatprep.subr.mxu0 %v254
    %330 = vmatpush1.msra.mxu0 %v253
    %331 = vmatprep.subr.mxu0 %v256
    %332 = vmatpush1.msra.mxu0 %v255
    %333 = vmatprep.subr.mxu0 %v258
    %334 = vmatpush1.msra.mxu0 %v257
    %335 = vmatprep.subr.mxu0 %v260
    %336 = vmatpush1.msra.mxu0 %v259
    %337 = vmatprep.subr.mxu0 %v262
    %338 = vmatpush1.msra.mxu0 %v261
    %339 = vmatprep.subr.mxu0 %v264
    %340 = vmatpush1.msra.mxu0 %v263
    %341 = vmatprep.subr.mxu0 %v266
    %342 = vmatpush1.msra.mxu0 %v265
    %343 = vmatprep.subr.mxu0 %v268
    %344 = vmatpush1.msra.mxu0 %v267
    %345 = vmatprep.subr.mxu0 %v270
    %346 = vmatpush1.msra.mxu0 %v269
    %347 = vmatprep.subr.mxu0 %v272
    %348 = vmatpush1.msra.mxu0 %v271
    %349 = vmatprep.subr.mxu0 %v274
    %350 = vmatpush1.msra.mxu0 %v273
    %351 = vmatprep.subr.mxu0 %v276
    %352 = vmatpush1.msra.mxu0 %v275
    %353 = vmatprep.subr.mxu0 %v278
    %354 = vmatpush1.msra.mxu0 %v277
    %355 = vmatprep.subr.mxu0 %v280
    %356 = vmatpush1.msra.mxu0 %v279
    %357 = vmatprep.subr.mxu0 %v282
    %358 = vmatpush1.msra.mxu0 %v281
    %359 = vmatprep.subr.mxu0 %v284
    %360 = vmatpush1.msra.mxu0 %v283
    %361 = vmatprep.subr.mxu0 %v286
    %362 = vmatpush1.msra.mxu0 %v285
    %363 = vmatprep.subr.mxu0 %v288
    %364 = vmatpush1.msra.mxu0 %v287
    %365 = vmatprep.subr.mxu0 %v290
    %366 = vmatpush1.msra.mxu0 %v289
    %367 = vmatprep.subr.mxu0 %v292
    %368 = vmatpush1.msra.mxu0 %v291
    %369 = vmatprep.subr.mxu0 %v294
    %370 = vmatpush1.msra.mxu0 %v293
    %371 = vmatprep.subr.mxu0 %v296
    %372 = vmatpush1.msra.mxu0 %v295
    %373 = vmatprep.mubr.f32.mxu0 %v232
    %374 = vmatmul.mubr.f32.gmra.mrb[0].mxu0 %v231
    %v375 = vpop.f32.mrb[0].mxu0
    %v376 = vadd.f32 %v302, %v375
    %v377 = vpop.f32.mrb[0].mxu0
    %v378 = vadd.f32 %v306, %v377
    %379 = vdwg.mxu0
    %v380 = vmax.f32 %v376, 0.0
    %v381 = vmax.f32 %v378, 0.0
    %v382 = vld [vmem:[#allocation8] sm:$0xff]
    %v383 = vld [vmem:[#allocation8 + $0x8] sm:$0xff]
    %v384 = vld [vmem:[#allocation8 + $0x10] sm:$0xff]
    %v385 = vld [vmem:[#allocation8 + $0x18] sm:$0xff]
    %v386 = vld [vmem:[#allocation8 + $0x20] sm:$0xff]
    %v387 = vld [vmem:[#allocation8 + $0x28] sm:$0xff]
    %v388 = vld [vmem:[#allocation8 + $0x30] sm:$0xff]
    %v389 = vld [vmem:[#allocation8 + $0x38] sm:$0xff]
    %v390 = vld [vmem:[#allocation8 + $0x40] sm:$0xff]
    %v391 = vld [vmem:[#allocation8 + $0x48] sm:$0xff]
    %v392 = vld [vmem:[#allocation8 + $0x50] sm:$0xff]
    %v393 = vld [vmem:[#allocation8 + $0x58] sm:$0xff]
    %v394 = vld [vmem:[#allocation8 + $0x60] sm:$0xff]
    %v395 = vld [vmem:[#allocation8 + $0x68] sm:$0xff]
    %v396 = vld [vmem:[#allocation8 + $0x70] sm:$0xff]
    %v397 = vld [vmem:[#allocation8 + $0x78] sm:$0xff]
    %v398 = vld [vmem:[#allocation8 + $0x80] sm:$0xff]
    %v399 = vld [vmem:[#allocation8 + $0x88] sm:$0xff]
    %v400 = vld [vmem:[#allocation8 + $0x90] sm:$0xff]
    %v401 = vld [vmem:[#allocation8 + $0x98] sm:$0xff]
    %v402 = vld [vmem:[#allocation8 + $0xa0] sm:$0xff]
    %v403 = vld [vmem:[#allocation8 + $0xa8] sm:$0xff]
    %v404 = vld [vmem:[#allocation8 + $0xb0] sm:$0xff]
    %v405 = vld [vmem:[#allocation8 + $0xb8] sm:$0xff]
    %v406 = vld [vmem:[#allocation8 + $0xc0] sm:$0xff]
    %v407 = vld [vmem:[#allocation8 + $0xc8] sm:$0xff]
    %v408 = vld [vmem:[#allocation8 + $0xd0] sm:$0xff]
    %v409 = vld [vmem:[#allocation8 + $0xd8] sm:$0xff]
    %v410 = vld [vmem:[#allocation8 + $0xe0] sm:$0xff]
    %v411 = vld [vmem:[#allocation8 + $0xe8] sm:$0xff]
    %v412 = vld [vmem:[#allocation8 + $0xf0] sm:$0xff]
    %v413 = vld [vmem:[#allocation8 + $0xf8] sm:$0xff]
    %v414 = vld [vmem:[%s6] sm:$0x1]
    %v416 = vlaneseq
    %v417 = vshrl.u32 %v416, 7
    %v418 = vsub.s32 0, %v417
    %v419 = vrot.slane %v414, %v418
    %421 = vmatprep.subr.mxu0 0.0
    %422 = vmatpush1.msra.mxu0 %v382
    %423 = vmatprep.subr.mxu0 0.0
    %424 = vmatpush1.msra.mxu0 %v383
    %425 = vmatprep.subr.mxu0 0.0
    %426 = vmatpush1.msra.mxu0 %v384
    %427 = vmatprep.subr.mxu0 0.0
    %428 = vmatpush1.msra.mxu0 %v385
    %429 = vmatprep.subr.mxu0 0.0
    %430 = vmatpush1.msra.mxu0 %v386
    %431 = vmatprep.subr.mxu0 0.0
    %432 = vmatpush1.msra.mxu0 %v387
    %433 = vmatprep.subr.mxu0 0.0
    %434 = vmatpush1.msra.mxu0 %v388
    %435 = vmatprep.subr.mxu0 0.0
    %436 = vmatpush1.msra.mxu0 %v389
    %437 = vmatprep.subr.mxu0 0.0
    %438 = vmatpush1.msra.mxu0 %v390
    %439 = vmatprep.subr.mxu0 0.0
    %440 = vmatpush1.msra.mxu0 %v391
    %441 = vmatprep.subr.mxu0 0.0
    %442 = vmatpush1.msra.mxu0 %v392
    %443 = vmatprep.subr.mxu0 0.0
    %444 = vmatpush1.msra.mxu0 %v393
    %445 = vmatprep.subr.mxu0 0.0
    %446 = vmatpush1.msra.mxu0 %v394
    %447 = vmatprep.subr.mxu0 0.0
    %448 = vmatpush1.msra.mxu0 %v395
    %449 = vmatprep.subr.mxu0 0.0
    %450 = vmatpush1.msra.mxu0 %v396
    %451 = vmatprep.subr.mxu0 0.0
    %452 = vmatpush1.msra.mxu0 %v397
    %453 = vmatprep.subr.mxu0 0.0
    %454 = vmatpush1.msra.mxu0 %v398
    %455 = vmatprep.subr.mxu0 0.0
    %456 = vmatpush1.msra.mxu0 %v399
    %457 = vmatprep.subr.mxu0 0.0
    %458 = vmatpush1.msra.mxu0 %v400
    %459 = vmatprep.subr.mxu0 0.0
    %460 = vmatpush1.msra.mxu0 %v401
    %461 = vmatprep.subr.mxu0 0.0
    %462 = vmatpush1.msra.mxu0 %v402
    %463 = vmatprep.subr.mxu0 0.0
    %464 = vmatpush1.msra.mxu0 %v403
    %465 = vmatprep.subr.mxu0 0.0
    %466 = vmatpush1.msra.mxu0 %v404
    %467 = vmatprep.subr.mxu0 0.0
    %468 = vmatpush1.msra.mxu0 %v405
    %469 = vmatprep.subr.mxu0 0.0
    %470 = vmatpush1.msra.mxu0 %v406
    %471 = vmatprep.subr.mxu0 0.0
    %472 = vmatpush1.msra.mxu0 %v407
    %473 = vmatprep.subr.mxu0 0.0
    %474 = vmatpush1.msra.mxu0 %v408
    %475 = vmatprep.subr.mxu0 0.0
    %476 = vmatpush1.msra.mxu0 %v409
    %477 = vmatprep.subr.mxu0 0.0
    %478 = vmatpush1.msra.mxu0 %v410
    %479 = vmatprep.subr.mxu0 0.0
    %480 = vmatpush1.msra.mxu0 %v411
    %481 = vmatprep.subr.mxu0 0.0
    %482 = vmatpush1.msra.mxu0 %v412
    %483 = vmatprep.subr.mxu0 0.0
    %484 = vmatpush1.msra.mxu0 %v413
    %485 = vmatprep.mubr.f32.mxu0 %v381
    %486 = vmatmul.mubr.f32.gmra.mrb[0].mxu0 %v380
    %v487 = vpop.f32.mrb[0].mxu0
    %v488 = vadd.f32 %v419, %v487
    %v489 = vpop.f32.mrb[0].mxu0
    %490 = vdwg.mxu0
    %v491 = vxor.u32 %v488, 2147483648
    %v492 = vmul.f32 %v491, 1.442695
    %v493 = vpow.pop %v492
    %v494 = vadd.f32 %v493, 1.0
    %v495 = vrcp.pop %v494
    %v496 = vmul.f32 1.0, %v495
    %497 = vst [vmem:[#allocation10] sm:$0xf] %v496
    // Predicated region
    $region46: #{tpu_custom_call.1} parent=1 // pred_check
      _
    $region47: #{tpu_custom_call.1} parent=1 // pred_check_branch
      %499 = sbr.rel (0) target = $region49
    $region48: #{tpu_custom_call.1} parent=1 // pred_region
      %s501 = ssub.s32 64, 64
      %502 = vsyncadd [#allocation4], %s501
      %s504 = sshll.u32 [#allocation10], 4
      %s505 = int_to_ptr.vmem [resolvable:$true] %s504
      %507 = dma.vmem_to_hbm [thread:$0]  %s505, 64, %s7, [#allocation4]
    $region49: #{tpu_custom_call.1} parent=1 // pred_fallthru
      _
    // Predicated region
    $region50: #{tpu_custom_call.1} parent=1 // pred_check
      _
    $region51: #{tpu_custom_call.1} parent=1 // pred_check_branch
      %509 = sbr.rel (0) target = $region53
    $region52: #{tpu_custom_call.1} parent=1 // pred_region
      %510 = dma.done [#allocation4], 64
    $region53: #{tpu_custom_call.1} parent=1 // pred_fallthru
      _
    %511 = vsyncpa [#allocation3], 1
    %512 = vsyncpa [#allocation6], 1
    %513 = vsyncpa [#allocation9], 1
    %514 = vsyncpa [#allocation4], 1

</llo_original>
